<compile_context>
chip_gen: v7x
topology: tpu7x:2x2x1
jax: 0.10.0
libtpu: 0.0.40
codegen_flags: <defaults>
</compile_context>

<pallas_src>
import jax
import jax.numpy as jnp
from jax.experimental import pallas as pl
from jax.experimental.pallas import tpu as pltpu


def mlp_kernel(x_ref, w1_ref, b1_ref, w2_ref, b2_ref, w3_ref, b3_ref, o_ref):
    # lin1 (bf16 MXU, f32 accumulate) + bias + ReLU (f32 elementwise)
    h = jnp.dot(x_ref[...], w1_ref[...], preferred_element_type=jnp.float32)
    h = jnp.maximum(h + b1_ref[...], 0.0)
    # lin2
    h = jnp.dot(h.astype(w2_ref.dtype), w2_ref[...],
                preferred_element_type=jnp.float32)
    h = jnp.maximum(h + b2_ref[...], 0.0)
    # lin3
    out = jnp.dot(h.astype(w3_ref.dtype), w3_ref[...],
                  preferred_element_type=jnp.float32)
    o_ref[...] = (out + b3_ref[...]).astype(o_ref.dtype)


def _round_up(x, m):
    return ((x + m - 1) // m) * m


def _pad2d(a, rows, cols, dtype):
    a = a.astype(dtype)
    return jnp.pad(a, ((0, rows - a.shape[0]), (0, cols - a.shape[1])))


def mlp_pallas(x, w1, b1, w2, b2, w3, b3, *, tm=256,
               compute_dtype=jnp.bfloat16):
    N, input_dim = x.shape
    hidden_dim = w1.shape[1]
    output_dim = w3.shape[1]
    out_dtype = x.dtype

    LANE = 128
    d_in = _round_up(input_dim, LANE)
    d_hid = _round_up(hidden_dim, LANE)
    d_out = _round_up(output_dim, LANE)

    # Row tile: multiple of 8 sublanes, target 256 rows for the MXU, but no larger
    # than the lane-rounded batch (avoids pointless padding for tiny batches).
    tm = _round_up(max(8, min(tm, _round_up(N, LANE))), 8)
    n_pad = _round_up(N, tm)
    grid = (n_pad // tm,)

    # Zero-pad rows/features; MXU operands in bf16, biases stay f32 (f32 bias-add).
    xp = _pad2d(x, n_pad, d_in, compute_dtype)
    w1p = _pad2d(w1, d_in, d_hid, compute_dtype)
    w2p = _pad2d(w2, d_hid, d_hid, compute_dtype)
    w3p = _pad2d(w3, d_hid, d_out, compute_dtype)
    b1p = _pad2d(b1.reshape(1, hidden_dim), 1, d_hid, jnp.float32)
    b2p = _pad2d(b2.reshape(1, hidden_dim), 1, d_hid, jnp.float32)
    b3p = _pad2d(b3.reshape(1, output_dim), 1, d_out, jnp.float32)

    # Grid-invariant operands: whole array resident in VMEM (single buffer, no
    # per-step pipeline DMA / double buffering).
    resident = pl.BlockSpec(memory_space=pltpu.MemorySpace.VMEM)

    out_padded = pl.pallas_call(
        mlp_kernel,
        out_shape=jax.ShapeDtypeStruct((n_pad, d_out), out_dtype),
        grid_spec=pltpu.PrefetchScalarGridSpec(
            num_scalar_prefetch=0,
            grid=grid,
            in_specs=[
                pl.BlockSpec((tm, d_in), lambda i: (i, 0)),  # x row tile (pipelined)
                resident,  # w1
                resident,  # b1
                resident,  # w2
                resident,  # b2
                resident,  # w3
                resident,  # b3
            ],
            out_specs=pl.BlockSpec((tm, d_out), lambda i: (i, 0)),
        ),
        compiler_params=pltpu.CompilerParams(
            dimension_semantics=("parallel",),
            vmem_limit_bytes=64 * 1024 * 1024,
        ),
    )(xp, w1p, b1p, w2p, b2p, w3p, b3p)

    return out_padded[:N, :output_dim]


def _init_linear(key, fan_in, fan_out, dtype=jnp.float32):
    # Deterministic init mimicking nn.Linear.reset_parameters (uniform bounds).
    kw, kb = jax.random.split(key)
    bound = 1.0 / jnp.sqrt(fan_in)
    w = jax.random.uniform(kw, (fan_in, fan_out), dtype, -bound, bound)
    b = jax.random.uniform(kb, (fan_out,), dtype, -bound, bound)
    return w, b


def _reference_bf16(x, w1, b1, w2, b2, w3, b3):
    # Pure-JAX reference using the same bf16-operand / f32-accumulate recipe.
    bf = jnp.bfloat16
    h = jnp.dot(x.astype(bf), w1.astype(bf), preferred_element_type=jnp.float32) + b1
    h = jnp.maximum(h, 0.0)
    h = jnp.dot(h.astype(bf), w2.astype(bf), preferred_element_type=jnp.float32) + b2
    h = jnp.maximum(h, 0.0)
    return jnp.dot(h.astype(bf), w3.astype(bf), preferred_element_type=jnp.float32) + b3


if __name__ == "__main__":
    key = jax.random.PRNGKey(0)
    k_x, k1, k2, k3 = jax.random.split(key, 4)

    batch = 16
    input_dim = 32
    hidden_dim = 64
    output_dim = 32

    x = jax.random.normal(k_x, (batch, input_dim), jnp.float32)
    w1, b1 = _init_linear(k1, input_dim, hidden_dim)
    w2, b2 = _init_linear(k2, hidden_dim, hidden_dim)
    w3, b3 = _init_linear(k3, hidden_dim, output_dim)

    out = mlp_pallas(x, w1, b1, w2, b2, w3, b3)
    out = jax.block_until_ready(out)

    ref = _reference_bf16(x, w1, b1, w2, b2, w3, b3)
    assert out.shape == (batch, output_dim), "bad output shape"
    assert jnp.allclose(out, ref, atol=1e-2, rtol=1e-2), "mismatch vs reference"

    print("KERNEL_OK")
</pallas_src>

<mosaic_0001>
module attributes {stable_mosaic.version = 11 : i64} {
  func.func @mlp_kernel(%arg0: i32, %arg1: memref<128x128xbf16, #tpu.memory_space<vmem>>, %arg2: memref<128x128xbf16, #tpu.memory_space<vmem>>, %arg3: memref<1x128xf32, #tpu.memory_space<vmem>>, %arg4: memref<128x128xbf16, #tpu.memory_space<vmem>>, %arg5: memref<1x128xf32, #tpu.memory_space<vmem>>, %arg6: memref<128x128xbf16, #tpu.memory_space<vmem>>, %arg7: memref<1x128xf32, #tpu.memory_space<vmem>>, %arg8: memref<128x128xf32, #tpu.memory_space<vmem>>) attributes {dimension_semantics = [#tpu.dimension_semantics<parallel>], iteration_bounds = array<i64: 1>, scalar_prefetch = 0 : i64, scratch_operands = 0 : i64, tpu.core_type = #tpu.core_type<tc>, window_params = [{transform_indices = @transform_0, window_bounds = array<i64: 128, 128>}, {pipeline_mode = #tpu.pipeline_mode<synchronous>, transform_indices = @transform_1, window_bounds = array<i64: 128, 128>}, {pipeline_mode = #tpu.pipeline_mode<synchronous>, transform_indices = @transform_2, window_bounds = array<i64: 1, 128>}, {pipeline_mode = #tpu.pipeline_mode<synchronous>, transform_indices = @transform_3, window_bounds = array<i64: 128, 128>}, {pipeline_mode = #tpu.pipeline_mode<synchronous>, transform_indices = @transform_4, window_bounds = array<i64: 1, 128>}, {pipeline_mode = #tpu.pipeline_mode<synchronous>, transform_indices = @transform_5, window_bounds = array<i64: 128, 128>}, {pipeline_mode = #tpu.pipeline_mode<synchronous>, transform_indices = @transform_6, window_bounds = array<i64: 1, 128>}, {transform_indices = @transform_7, window_bounds = array<i64: 128, 128>}]} {
    %c0 = arith.constant 0 : index
    %c0_0 = arith.constant 0 : index
    %0 = vector.load %arg1[%c0, %c0_0] : memref<128x128xbf16, #tpu.memory_space<vmem>>, vector<128x128xbf16>
    %c0_1 = arith.constant 0 : index
    %c0_2 = arith.constant 0 : index
    %1 = vector.load %arg2[%c0_1, %c0_2] : memref<128x128xbf16, #tpu.memory_space<vmem>>, vector<128x128xbf16>
    %cst = arith.constant dense<0.000000e+00> : vector<128x128xf32>
    %2 = tpu.matmul %0, %1, %cst {dimension_numbers = #tpu.dot_dimension_numbers<[1], [0], [0], [1], [0, 0, 1, 1], [], []>} : vector<128x128xbf16>, vector<128x128xbf16>, vector<128x128xf32> -> vector<128x128xf32>
    %c0_3 = arith.constant 0 : index
    %c0_4 = arith.constant 0 : index
    %3 = vector.load %arg3[%c0_3, %c0_4] : memref<1x128xf32, #tpu.memory_space<vmem>>, vector<1x128xf32>
    %4 = vector.broadcast %3 : vector<1x128xf32> to vector<128x128xf32>
    %5 = arith.addf %2, %4 : vector<128x128xf32>
    %cst_5 = arith.constant 0.000000e+00 : f32
    %6 = vector.broadcast %cst_5 : f32 to vector<128x128xf32>
    %7 = arith.maximumf %5, %6 : vector<128x128xf32>
    %8 = arith.truncf %7 : vector<128x128xf32> to vector<128x128xbf16>
    %c0_6 = arith.constant 0 : index
    %c0_7 = arith.constant 0 : index
    %9 = vector.load %arg4[%c0_6, %c0_7] : memref<128x128xbf16, #tpu.memory_space<vmem>>, vector<128x128xbf16>
    %cst_8 = arith.constant dense<0.000000e+00> : vector<128x128xf32>
    %10 = tpu.matmul %8, %9, %cst_8 {dimension_numbers = #tpu.dot_dimension_numbers<[1], [0], [0], [1], [0, 0, 1, 1], [], []>} : vector<128x128xbf16>, vector<128x128xbf16>, vector<128x128xf32> -> vector<128x128xf32>
    %c0_9 = arith.constant 0 : index
    %c0_10 = arith.constant 0 : index
    %11 = vector.load %arg5[%c0_9, %c0_10] : memref<1x128xf32, #tpu.memory_space<vmem>>, vector<1x128xf32>
    %12 = vector.broadcast %11 : vector<1x128xf32> to vector<128x128xf32>
    %13 = arith.addf %10, %12 : vector<128x128xf32>
    %cst_11 = arith.constant 0.000000e+00 : f32
    %14 = vector.broadcast %cst_11 : f32 to vector<128x128xf32>
    %15 = arith.maximumf %13, %14 : vector<128x128xf32>
    %16 = arith.truncf %15 : vector<128x128xf32> to vector<128x128xbf16>
    %c0_12 = arith.constant 0 : index
    %c0_13 = arith.constant 0 : index
    %17 = vector.load %arg6[%c0_12, %c0_13] : memref<128x128xbf16, #tpu.memory_space<vmem>>, vector<128x128xbf16>
    %cst_14 = arith.constant dense<0.000000e+00> : vector<128x128xf32>
    %18 = tpu.matmul %16, %17, %cst_14 {dimension_numbers = #tpu.dot_dimension_numbers<[1], [0], [0], [1], [0, 0, 1, 1], [], []>} : vector<128x128xbf16>, vector<128x128xbf16>, vector<128x128xf32> -> vector<128x128xf32>
    %c0_15 = arith.constant 0 : index
    %c0_16 = arith.constant 0 : index
    %19 = vector.load %arg7[%c0_15, %c0_16] : memref<1x128xf32, #tpu.memory_space<vmem>>, vector<1x128xf32>
    %20 = vector.broadcast %19 : vector<1x128xf32> to vector<128x128xf32>
    %21 = arith.addf %18, %20 : vector<128x128xf32>
    %c0_17 = arith.constant 0 : index
    %c0_18 = arith.constant 0 : index
    %22 = vector.load %arg8[%c0_17, %c0_18] : memref<128x128xf32, #tpu.memory_space<vmem>>, vector<128x128xf32>
    tpu.vector_store %arg8[%c0_17, %c0_18], %21 {strides = array<i32>} : memref<128x128xf32, #tpu.memory_space<vmem>>, vector<128x128xf32>,
    return
  }
  func.func @transform_0(%arg0: i32) -> (i32, i32) {
    %c0_i32 = arith.constant 0 : i32
    %c0_i32_0 = arith.constant 0 : i32
    return %arg0, %c0_i32 : i32, i32
  }
  func.func @transform_1(%arg0: i32) -> (i32, i32) {
    %c0_i32 = arith.constant 0 : i32
    %c0_i32_0 = arith.constant 0 : i32
    %c0_i32_1 = arith.constant 0 : i32
    return %c0_i32, %c0_i32_0 : i32, i32
  }
  func.func @transform_2(%arg0: i32) -> (i32, i32) {
    %c0_i32 = arith.constant 0 : i32
    %c0_i32_0 = arith.constant 0 : i32
    %c0_i32_1 = arith.constant 0 : i32
    return %c0_i32, %c0_i32_0 : i32, i32
  }
  func.func @transform_3(%arg0: i32) -> (i32, i32) {
    %c0_i32 = arith.constant 0 : i32
    %c0_i32_0 = arith.constant 0 : i32
    %c0_i32_1 = arith.constant 0 : i32
    return %c0_i32, %c0_i32_0 : i32, i32
  }
  func.func @transform_4(%arg0: i32) -> (i32, i32) {
    %c0_i32 = arith.constant 0 : i32
    %c0_i32_0 = arith.constant 0 : i32
    %c0_i32_1 = arith.constant 0 : i32
    return %c0_i32, %c0_i32_0 : i32, i32
  }
  func.func @transform_5(%arg0: i32) -> (i32, i32) {
    %c0_i32 = arith.constant 0 : i32
    %c0_i32_0 = arith.constant 0 : i32
    %c0_i32_1 = arith.constant 0 : i32
    return %c0_i32, %c0_i32_0 : i32, i32
  }
  func.func @transform_6(%arg0: i32) -> (i32, i32) {
    %c0_i32 = arith.constant 0 : i32
    %c0_i32_0 = arith.constant 0 : i32
    %c0_i32_1 = arith.constant 0 : i32
    return %c0_i32, %c0_i32_0 : i32, i32
  }
  func.func @transform_7(%arg0: i32) -> (i32, i32) {
    %c0_i32 = arith.constant 0 : i32
    %c0_i32_0 = arith.constant 0 : i32
    return %arg0, %c0_i32 : i32, i32
  }
}

</mosaic_0001>

<llo_original>
// kernel: tpu_custom_call.1
$region0: #{tpu_custom_call.1}
  #allocation0 [shape = 'u32[]', space=smem, size = 0x4, offset = 0x4, fixed_abs, tag = 'smem constant byte address 0x4 - core index']
  #allocation1 [shape = 'u32[144,128]{1,0:T(1,128)}', space=vmem, size = 0x12000, scoped, tag = 'internal scratch']
  %s0 = inlined_call_operand.hbm [shape: bf16[128,128], index: 0, kind: input, shape index: {}]
  %s1 = inlined_call_operand.hbm [shape: bf16[128,128], index: 1, kind: input, shape index: {}]
  %s2 = inlined_call_operand.hbm [shape: f32[1,128], index: 2, kind: input, shape index: {}]
  %s3 = inlined_call_operand.hbm [shape: bf16[128,128], index: 3, kind: input, shape index: {}]
  %s4 = inlined_call_operand.hbm [shape: f32[1,128], index: 4, kind: input, shape index: {}]
  %s5 = inlined_call_operand.hbm [shape: bf16[128,128], index: 5, kind: input, shape index: {}]
  %s6 = inlined_call_operand.hbm [shape: f32[1,128], index: 6, kind: input, shape index: {}]
  %s7 = inlined_call_operand.hbm [shape: f32[128,128], index: 7, kind: output, shape index: {}]
  %s8 = sld [smem:[#allocation0]]
  $region66: #{tpu_custom_call.1} parent=0
    _
  %s10 = ssub.s32 1, %s8
  %s11 = scalar_select 0, %s10, %s8
  $region1: #{tpu_custom_call.1} parent=0
    #allocation2 [shape = 'u8[32768]{0}', space=vmem, size = 0x8000, scoped, tag = 'input window, operand 0, single buffered']
    #allocation3 [shape = 's32[1]{0}', space=sflag, size = 0x4, scoped, tag = 'scoped memory for tpu_custom_call.1']
    #allocation4 [shape = 's32[1]{0}', space=sflag, size = 0x4, scoped, tag = 'scoped memory for tpu_custom_call.1']
    #allocation5 [shape = 'u8[32768]{0}', space=vmem, size = 0x8000, scoped, tag = 'input window, operand 1, single buffered']
    #allocation6 [shape = 's32[1]{0}', space=sflag, size = 0x4, scoped, tag = 'scoped memory for tpu_custom_call.1']
    #allocation7 [shape = 'u8[512]{0}', space=vmem, size = 0x400, scoped, tag = 'input window, operand 2, single buffered']
    #allocation8 [shape = 'u8[32768]{0}', space=vmem, size = 0x8000, scoped, tag = 'input window, operand 3, single buffered']
    #allocation9 [shape = 's32[1]{0}', space=sflag, size = 0x4, scoped, tag = 'scoped memory for tpu_custom_call.1']
    #allocation10 [shape = 'u8[512]{0}', space=vmem, size = 0x400, scoped, tag = 'input window, operand 4, single buffered']
    #allocation11 [shape = 'u8[32768]{0}', space=vmem, size = 0x8000, scoped, tag = 'input window, operand 5, single buffered']
    #allocation12 [shape = 's32[1]{0}', space=sflag, size = 0x4, scoped, tag = 'scoped memory for tpu_custom_call.1']
    #allocation13 [shape = 'u8[512]{0}', space=vmem, size = 0x400, scoped, tag = 'input window, operand 6, single buffered']
    #allocation14 [shape = 'u8[65536]{0}', space=vmem, size = 0x10000, scoped, tag = 'output window, operand 0, single buffered']
    %12 = vsyncpa [#allocation3], 0
    %13 = vsyncpa [#allocation6], 0
    %14 = vsyncpa [#allocation9], 0
    %15 = vsyncpa [#allocation12], 0
    %16 = vsyncpa [#allocation4], 0
    // Predicated region
    $region2: #{tpu_custom_call.1} parent=1 // pred_check
      _
    $region3: #{tpu_custom_call.1} parent=1 // pred_check_branch
      %18 = sbr.rel (0) target = $region5
    $region4: #{tpu_custom_call.1} parent=1 // pred_region
      %s20 = ssub.s32 1024, 1024
      %21 = vsyncadd [#allocation3], %s20
      %s22 = sshll.u32 [#allocation2], 4
      %s23 = int_to_ptr.vmem [resolvable:$true] %s22
      %28 = dma.hbm_to_vmem [thread:$0]  %s0, 1024, %s23, [#allocation3], 64, 64, 4
    $region5: #{tpu_custom_call.1} parent=1 // pred_fallthru
      _
    // Predicated region
    $region6: #{tpu_custom_call.1} parent=1 // pred_check
      _
    $region7: #{tpu_custom_call.1} parent=1 // pred_check_branch
      %30 = sbr.rel (0) target = $region9
    $region8: #{tpu_custom_call.1} parent=1 // pred_region
      %s32 = ssub.s32 1024, 1024
      %33 = vsyncadd [#allocation6], %s32
      %s34 = sshll.u32 [#allocation5], 4
      %s35 = int_to_ptr.vmem [resolvable:$true] %s34
      %40 = dma.hbm_to_vmem [thread:$0]  %s1, 1024, %s35, [#allocation6], 64, 64, 4
    $region9: #{tpu_custom_call.1} parent=1 // pred_fallthru
      _
    // Predicated region
    $region10: #{tpu_custom_call.1} parent=1 // pred_check
      _
    $region11: #{tpu_custom_call.1} parent=1 // pred_check_branch
      %42 = sbr.rel (0) target = $region13
    $region12: #{tpu_custom_call.1} parent=1 // pred_region
      %s44 = ssub.s32 16, 16
      %45 = vsyncadd [#allocation6], %s44
      %s47 = sshll.u32 [#allocation7], 4
      %s48 = int_to_ptr.vmem [resolvable:$true] %s47
      %50 = dma.hbm_to_vmem [thread:$0]  %s2, 16, %s48, [#allocation6]
    $region13: #{tpu_custom_call.1} parent=1 // pred_fallthru
      _
    // Predicated region
    $region14: #{tpu_custom_call.1} parent=1 // pred_check
      _
    $region15: #{tpu_custom_call.1} parent=1 // pred_check_branch
      %52 = sbr.rel (0) target = $region17
    $region16: #{tpu_custom_call.1} parent=1 // pred_region
      %s54 = ssub.s32 1024, 1024
      %55 = vsyncadd [#allocation9], %s54
      %s56 = sshll.u32 [#allocation8], 4
      %s57 = int_to_ptr.vmem [resolvable:$true] %s56
      %62 = dma.hbm_to_vmem [thread:$0]  %s3, 1024, %s57, [#allocation9], 64, 64, 4
    $region17: #{tpu_custom_call.1} parent=1 // pred_fallthru
      _
    // Predicated region
    $region18: #{tpu_custom_call.1} parent=1 // pred_check
      _
    $region19: #{tpu_custom_call.1} parent=1 // pred_check_branch
      %64 = sbr.rel (0) target = $region21
    $region20: #{tpu_custom_call.1} parent=1 // pred_region
      %s66 = ssub.s32 16, 16
      %67 = vsyncadd [#allocation9], %s66
      %s69 = sshll.u32 [#allocation10], 4
      %s70 = int_to_ptr.vmem [resolvable:$true] %s69
      %72 = dma.hbm_to_vmem [thread:$0]  %s4, 16, %s70, [#allocation9]
    $region21: #{tpu_custom_call.1} parent=1 // pred_fallthru
      _
    // Predicated region
    $region22: #{tpu_custom_call.1} parent=1 // pred_check
      _
    $region23: #{tpu_custom_call.1} parent=1 // pred_check_branch
      %74 = sbr.rel (0) target = $region25
    $region24: #{tpu_custom_call.1} parent=1 // pred_region
      %s76 = ssub.s32 1024, 1024
      %77 = vsyncadd [#allocation12], %s76
      %s78 = sshll.u32 [#allocation11], 4
      %s79 = int_to_ptr.vmem [resolvable:$true] %s78
      %84 = dma.hbm_to_vmem [thread:$0]  %s5, 1024, %s79, [#allocation12], 64, 64, 4
    $region25: #{tpu_custom_call.1} parent=1 // pred_fallthru
      _
    // Predicated region
    $region26: #{tpu_custom_call.1} parent=1 // pred_check
      _
    $region27: #{tpu_custom_call.1} parent=1 // pred_check_branch
      %86 = sbr.rel (0) target = $region29
    $region28: #{tpu_custom_call.1} parent=1 // pred_region
      %s88 = ssub.s32 16, 16
      %89 = vsyncadd [#allocation12], %s88
      %s91 = sshll.u32 [#allocation13], 4
      %s92 = int_to_ptr.vmem [resolvable:$true] %s91
      %94 = dma.hbm_to_vmem [thread:$0]  %s6, 16, %s92, [#allocation12]
    $region29: #{tpu_custom_call.1} parent=1 // pred_fallthru
      _
    // Predicated region
    $region30: #{tpu_custom_call.1} parent=1 // pred_check
      _
    $region31: #{tpu_custom_call.1} parent=1 // pred_check_branch
      %96 = sbr.rel (0) target = $region33
    $region32: #{tpu_custom_call.1} parent=1 // pred_region
      %97 = dma.done [#allocation3], 1024
    $region33: #{tpu_custom_call.1} parent=1 // pred_fallthru
      _
    // Predicated region
    $region34: #{tpu_custom_call.1} parent=1 // pred_check
      _
    $region35: #{tpu_custom_call.1} parent=1 // pred_check_branch
      %99 = sbr.rel (0) target = $region37
    $region36: #{tpu_custom_call.1} parent=1 // pred_region
      %100 = dma.done [#allocation6], 1024
    $region37: #{tpu_custom_call.1} parent=1 // pred_fallthru
      _
    // Predicated region
    $region38: #{tpu_custom_call.1} parent=1 // pred_check
      _
    $region39: #{tpu_custom_call.1} parent=1 // pred_check_branch
      %102 = sbr.rel (0) target = $region41
    $region40: #{tpu_custom_call.1} parent=1 // pred_region
      %103 = dma.done [#allocation6], 16
    $region41: #{tpu_custom_call.1} parent=1 // pred_fallthru
      _
    // Predicated region
    $region42: #{tpu_custom_call.1} parent=1 // pred_check
      _
    $region43: #{tpu_custom_call.1} parent=1 // pred_check_branch
      %105 = sbr.rel (0) target = $region45
    $region44: #{tpu_custom_call.1} parent=1 // pred_region
      %106 = dma.done [#allocation9], 1024
    $region45: #{tpu_custom_call.1} parent=1 // pred_fallthru
      _
    // Predicated region
    $region46: #{tpu_custom_call.1} parent=1 // pred_check
      _
    $region47: #{tpu_custom_call.1} parent=1 // pred_check_branch
      %108 = sbr.rel (0) target = $region49
    $region48: #{tpu_custom_call.1} parent=1 // pred_region
      %109 = dma.done [#allocation9], 16
    $region49: #{tpu_custom_call.1} parent=1 // pred_fallthru
      _
    // Predicated region
    $region50: #{tpu_custom_call.1} parent=1 // pred_check
      _
    $region51: #{tpu_custom_call.1} parent=1 // pred_check_branch
      %111 = sbr.rel (0) target = $region53
    $region52: #{tpu_custom_call.1} parent=1 // pred_region
      %112 = dma.done [#allocation12], 1024
    $region53: #{tpu_custom_call.1} parent=1 // pred_fallthru
      _
    // Predicated region
    $region54: #{tpu_custom_call.1} parent=1 // pred_check
      _
    $region55: #{tpu_custom_call.1} parent=1 // pred_check_branch
      %114 = sbr.rel (0) target = $region57
    $region56: #{tpu_custom_call.1} parent=1 // pred_region
      %115 = dma.done [#allocation12], 16
    $region57: #{tpu_custom_call.1} parent=1 // pred_fallthru
      _
    %v117 = vld [vmem:[#allocation2] sm:$0xf]
    %v118 = vld [vmem:[#allocation2 + $0x4] sm:$0xf]
    %v119 = vld [vmem:[#allocation2 + $0x8] sm:$0xf]
    %v120 = vld [vmem:[#allocation2 + $0xc] sm:$0xf]
    %v121 = vld [vmem:[#allocation2 + $0x10] sm:$0xf]
    %v122 = vld [vmem:[#allocation2 + $0x14] sm:$0xf]
    %v123 = vld [vmem:[#allocation2 + $0x18] sm:$0xf]
    %v124 = vld [vmem:[#allocation2 + $0x1c] sm:$0xf]
    %v125 = vld [vmem:[#allocation2 + $0x20] sm:$0xf]
    %v126 = vld [vmem:[#allocation2 + $0x24] sm:$0xf]
    %v127 = vld [vmem:[#allocation2 + $0x28] sm:$0xf]
    %v128 = vld [vmem:[#allocation2 + $0x2c] sm:$0xf]
    %v129 = vld [vmem:[#allocation2 + $0x30] sm:$0xf]
    %v130 = vld [vmem:[#allocation2 + $0x34] sm:$0xf]
    %v131 = vld [vmem:[#allocation2 + $0x38] sm:$0xf]
    %v132 = vld [vmem:[#allocation2 + $0x3c] sm:$0xf]
    %v133 = vld [vmem:[#allocation5] sm:$0xf]
    %v134 = vld [vmem:[#allocation5 + $0x4] sm:$0xf]
    %v135 = vld [vmem:[#allocation5 + $0x8] sm:$0xf]
    %v136 = vld [vmem:[#allocation5 + $0xc] sm:$0xf]
    %v137 = vld [vmem:[#allocation5 + $0x10] sm:$0xf]
    %v138 = vld [vmem:[#allocation5 + $0x14] sm:$0xf]
    %v139 = vld [vmem:[#allocation5 + $0x18] sm:$0xf]
    %v140 = vld [vmem:[#allocation5 + $0x1c] sm:$0xf]
    %v141 = vld [vmem:[#allocation5 + $0x20] sm:$0xf]
    %v142 = vld [vmem:[#allocation5 + $0x24] sm:$0xf]
    %v143 = vld [vmem:[#allocation5 + $0x28] sm:$0xf]
    %v144 = vld [vmem:[#allocation5 + $0x2c] sm:$0xf]
    %v145 = vld [vmem:[#allocation5 + $0x30] sm:$0xf]
    %v146 = vld [vmem:[#allocation5 + $0x34] sm:$0xf]
    %v147 = vld [vmem:[#allocation5 + $0x38] sm:$0xf]
    %v148 = vld [vmem:[#allocation5 + $0x3c] sm:$0xf]
    %v149 = vld [vmem:[#allocation7] sm:$0x1]
    %v151 = vlaneseq
    %v152 = vshrl.u32 %v151, 7
    %v153 = vsub.s32 0, %v152
    %v154 = vrot.slane %v149, %v153
    %v172 = vunpack.c.l.b16 %v117
    %v173 = vunpack.c.l.b16 %v118
    %v174 = vunpack.c.l.b16 %v119
    %v175 = vunpack.c.l.b16 %v120
    %v176 = vunpack.c.l.b16 %v121
    %v177 = vunpack.c.l.b16 %v122
    %v178 = vunpack.c.l.b16 %v123
    %v179 = vunpack.c.l.b16 %v124
    %v180 = vunpack.c.l.b16 %v125
    %v181 = vunpack.c.l.b16 %v126
    %v182 = vunpack.c.l.b16 %v127
    %v183 = vunpack.c.l.b16 %v128
    %v184 = vunpack.c.l.b16 %v129
    %v185 = vunpack.c.l.b16 %v130
    %v186 = vunpack.c.l.b16 %v131
    %v187 = vunpack.c.l.b16 %v132
    %v188 = vpack.c.b16 %v173, %v172
    %v189 = vpack.c.b16 %v175, %v174
    %v190 = vpack.c.b16 %v177, %v176
    %v191 = vpack.c.b16 %v179, %v178
    %v192 = vpack.c.b16 %v181, %v180
    %v193 = vpack.c.b16 %v183, %v182
    %v194 = vpack.c.b16 %v185, %v184
    %v195 = vpack.c.b16 %v187, %v186
    %v220 = vunpack.c.l.b16 %v133
    %v221 = vunpack.c.l.b16 %v134
    %v222 = vunpack.c.l.b16 %v135
    %v223 = vunpack.c.l.b16 %v136
    %v224 = vunpack.c.l.b16 %v137
    %v225 = vunpack.c.l.b16 %v138
    %v226 = vunpack.c.l.b16 %v139
    %v227 = vunpack.c.l.b16 %v140
    %v228 = vunpack.c.l.b16 %v141
    %v229 = vunpack.c.l.b16 %v142
    %v230 = vunpack.c.l.b16 %v143
    %v231 = vunpack.c.l.b16 %v144
    %v232 = vunpack.c.l.b16 %v145
    %v233 = vunpack.c.l.b16 %v146
    %v234 = vunpack.c.l.b16 %v147
    %v235 = vunpack.c.l.b16 %v148
    %v236 = vpack.c.b16 %v221, %v220
    %v237 = vpack.c.b16 %v223, %v222
    %v238 = vpack.c.b16 %v225, %v224
    %v239 = vpack.c.b16 %v227, %v226
    %v240 = vpack.c.b16 %v229, %v228
    %v241 = vpack.c.b16 %v231, %v230
    %v242 = vpack.c.b16 %v233, %v232
    %v243 = vpack.c.b16 %v235, %v234
    %252 = vmatprep.subr.bf16.mxu0 0
    %253 = vmatpush1.bf16.msra.mxu0 %v236
    %254 = vmatprep.subr.bf16.mxu0 0
    %255 = vmatpush1.bf16.msra.mxu0 %v237
    %256 = vmatprep.subr.bf16.mxu0 0
    %257 = vmatpush1.bf16.msra.mxu0 %v238
    %258 = vmatprep.subr.bf16.mxu0 0
    %259 = vmatpush1.bf16.msra.mxu0 %v239
    %260 = vmatprep.subr.bf16.mxu0 0
    %261 = vmatpush1.bf16.msra.mxu0 %v240
    %262 = vmatprep.subr.bf16.mxu0 0
    %263 = vmatpush1.bf16.msra.mxu0 %v241
    %264 = vmatprep.subr.bf16.mxu0 0
    %265 = vmatpush1.bf16.msra.mxu0 %v242
    %266 = vmatprep.subr.bf16.mxu0 0
    %267 = vmatpush1.bf16.msra.mxu0 %v243
    %268 = vmatprep.subr.bf16.mxu0 0
    %269 = vmatpush1.bf16.msra.mxu0 0
    %270 = vmatprep.subr.bf16.mxu0 0
    %271 = vmatpush1.bf16.msra.mxu0 0
    %272 = vmatprep.subr.bf16.mxu0 0
    %273 = vmatpush1.bf16.msra.mxu0 0
    %274 = vmatprep.subr.bf16.mxu0 0
    %275 = vmatpush1.bf16.msra.mxu0 0
    %276 = vmatprep.subr.bf16.mxu0 0
    %277 = vmatpush1.bf16.msra.mxu0 0
    %278 = vmatprep.subr.bf16.mxu0 0
    %279 = vmatpush1.bf16.msra.mxu0 0
    %280 = vmatprep.subr.bf16.mxu0 0
    %281 = vmatpush1.bf16.msra.mxu0 0
    %282 = vmatprep.subr.bf16.mxu0 0
    %283 = vmatpush1.bf16.msra.mxu0 0
    %284 = vmatprep.mubr.bf16.mxu0 0
    %285 = vmatmul.mubr.bf16.gmra.mrb[0].mxu0 %v188
    %v286 = vpop.f32.mrb[0].mxu0
    %v287 = vadd.f32 %v154, %v286
    %v288 = vpop.f32.mrb[0].mxu0
    %v289 = vpop.f32.mrb[0].mxu0
    %v290 = vadd.f32 %v154, %v289
    %v291 = vpop.f32.mrb[0].mxu0
    %292 = vmatprep.mubr.bf16.mxu0 0
    %293 = vmatmul.mubr.bf16.gmra.mrb[0].mxu0 %v189
    %v294 = vpop.f32.mrb[0].mxu0
    %v295 = vadd.f32 %v154, %v294
    %v296 = vpop.f32.mrb[0].mxu0
    %v297 = vpop.f32.mrb[0].mxu0
    %v298 = vadd.f32 %v154, %v297
    %v299 = vpop.f32.mrb[0].mxu0
    %300 = vmatprep.mubr.bf16.mxu0 0
    %301 = vmatmul.mubr.bf16.gmra.mrb[0].mxu0 %v190
    %v302 = vpop.f32.mrb[0].mxu0
    %v303 = vadd.f32 %v154, %v302
    %v304 = vpop.f32.mrb[0].mxu0
    %v305 = vpop.f32.mrb[0].mxu0
    %v306 = vadd.f32 %v154, %v305
    %v307 = vpop.f32.mrb[0].mxu0
    %308 = vmatprep.mubr.bf16.mxu0 0
    %309 = vmatmul.mubr.bf16.gmra.mrb[0].mxu0 %v191
    %v310 = vpop.f32.mrb[0].mxu0
    %v311 = vadd.f32 %v154, %v310
    %v312 = vpop.f32.mrb[0].mxu0
    %v313 = vpop.f32.mrb[0].mxu0
    %v314 = vadd.f32 %v154, %v313
    %v315 = vpop.f32.mrb[0].mxu0
    %316 = vmatprep.mubr.bf16.mxu0 0
    %317 = vmatmul.mubr.bf16.gmra.mrb[0].mxu0 %v192
    %v318 = vpop.f32.mrb[0].mxu0
    %v319 = vadd.f32 %v154, %v318
    %v320 = vpop.f32.mrb[0].mxu0
    %v321 = vpop.f32.mrb[0].mxu0
    %v322 = vadd.f32 %v154, %v321
    %v323 = vpop.f32.mrb[0].mxu0
    %324 = vmatprep.mubr.bf16.mxu0 0
    %325 = vmatmul.mubr.bf16.gmra.mrb[0].mxu0 %v193
    %v326 = vpop.f32.mrb[0].mxu0
    %v327 = vadd.f32 %v154, %v326
    %v328 = vpop.f32.mrb[0].mxu0
    %v329 = vpop.f32.mrb[0].mxu0
    %v330 = vadd.f32 %v154, %v329
    %v331 = vpop.f32.mrb[0].mxu0
    %332 = vmatprep.mubr.bf16.mxu0 0
    %333 = vmatmul.mubr.bf16.gmra.mrb[0].mxu0 %v194
    %v334 = vpop.f32.mrb[0].mxu0
    %v335 = vadd.f32 %v154, %v334
    %v336 = vpop.f32.mrb[0].mxu0
    %v337 = vpop.f32.mrb[0].mxu0
    %v338 = vadd.f32 %v154, %v337
    %v339 = vpop.f32.mrb[0].mxu0
    %340 = vmatprep.mubr.bf16.mxu0 0
    %341 = vmatmul.mubr.bf16.gmra.mrb[0].mxu0 %v195
    %v342 = vpop.f32.mrb[0].mxu0
    %v343 = vadd.f32 %v154, %v342
    %v344 = vpop.f32.mrb[0].mxu0
    %v345 = vpop.f32.mrb[0].mxu0
    %v346 = vadd.f32 %v154, %v345
    %v347 = vpop.f32.mrb[0].mxu0
    %348 = vdwg.mxu0
    %v349 = vmax.f32 %v287, 0.0
    %v350 = vmax.f32 %v290, 0.0
    %v351 = vmax.f32 %v295, 0.0
    %v352 = vmax.f32 %v298, 0.0
    %v353 = vmax.f32 %v303, 0.0
    %v354 = vmax.f32 %v306, 0.0
    %v355 = vmax.f32 %v311, 0.0
    %v356 = vmax.f32 %v314, 0.0
    %v357 = vmax.f32 %v319, 0.0
    %v358 = vmax.f32 %v322, 0.0
    %v359 = vmax.f32 %v327, 0.0
    %v360 = vmax.f32 %v330, 0.0
    %v361 = vmax.f32 %v335, 0.0
    %v362 = vmax.f32 %v338, 0.0
    %v363 = vmax.f32 %v343, 0.0
    %v364 = vmax.f32 %v346, 0.0
    %v365 = vpack.c.bf16 %v350, %v349
    %v366 = vpack.c.bf16 %v352, %v351
    %v367 = vpack.c.bf16 %v354, %v353
    %v368 = vpack.c.bf16 %v356, %v355
    %v369 = vpack.c.bf16 %v358, %v357
    %v370 = vpack.c.bf16 %v360, %v359
    %v371 = vpack.c.bf16 %v362, %v361
    %v372 = vpack.c.bf16 %v364, %v363
    %v373 = vld [vmem:[#allocation8] sm:$0xf]
    %v374 = vld [vmem:[#allocation8 + $0x4] sm:$0xf]
    %v375 = vld [vmem:[#allocation8 + $0x8] sm:$0xf]
    %v376 = vld [vmem:[#allocation8 + $0xc] sm:$0xf]
    %v377 = vld [vmem:[#allocation8 + $0x10] sm:$0xf]
    %v378 = vld [vmem:[#allocation8 + $0x14] sm:$0xf]
    %v379 = vld [vmem:[#allocation8 + $0x18] sm:$0xf]
    %v380 = vld [vmem:[#allocation8 + $0x1c] sm:$0xf]
    %v381 = vld [vmem:[#allocation8 + $0x20] sm:$0xf]
    %v382 = vld [vmem:[#allocation8 + $0x24] sm:$0xf]
    %v383 = vld [vmem:[#allocation8 + $0x28] sm:$0xf]
    %v384 = vld [vmem:[#allocation8 + $0x2c] sm:$0xf]
    %v385 = vld [vmem:[#allocation8 + $0x30] sm:$0xf]
    %v386 = vld [vmem:[#allocation8 + $0x34] sm:$0xf]
    %v387 = vld [vmem:[#allocation8 + $0x38] sm:$0xf]
    %v388 = vld [vmem:[#allocation8 + $0x3c] sm:$0xf]
    %v389 = vld [vmem:[#allocation10] sm:$0x1]
    %v391 = vlaneseq
    %v392 = vshrl.u32 %v391, 7
    %v393 = vsub.s32 0, %v392
    %v394 = vrot.slane %v389, %v393
    %v412 = vunpack.c.l.b16 %v373
    %v413 = vunpack.c.l.b16 %v374
    %v414 = vunpack.c.l.b16 %v375
    %v415 = vunpack.c.l.b16 %v376
    %v416 = vunpack.c.l.b16 %v377
    %v417 = vunpack.c.l.b16 %v378
    %v418 = vunpack.c.l.b16 %v379
    %v419 = vunpack.c.l.b16 %v380
    %v420 = vunpack.c.l.b16 %v381
    %v421 = vunpack.c.l.b16 %v382
    %v422 = vunpack.c.l.b16 %v383
    %v423 = vunpack.c.l.b16 %v384
    %v424 = vunpack.c.l.b16 %v385
    %v425 = vunpack.c.l.b16 %v386
    %v426 = vunpack.c.l.b16 %v387
    %v427 = vunpack.c.l.b16 %v388
    %v428 = vpack.c.b16 %v413, %v412
    %v429 = vpack.c.b16 %v415, %v414
    %v430 = vpack.c.b16 %v417, %v416
    %v431 = vpack.c.b16 %v419, %v418
    %v432 = vpack.c.b16 %v421, %v420
    %v433 = vpack.c.b16 %v423, %v422
    %v434 = vpack.c.b16 %v425, %v424
    %v435 = vpack.c.b16 %v427, %v426
    %444 = vmatprep.subr.bf16.mxu0 0
    %445 = vmatpush1.bf16.msra.mxu0 %v428
    %446 = vmatprep.subr.bf16.mxu0 0
    %447 = vmatpush1.bf16.msra.mxu0 %v429
    %448 = vmatprep.subr.bf16.mxu0 0
    %449 = vmatpush1.bf16.msra.mxu0 %v430
    %450 = vmatprep.subr.bf16.mxu0 0
    %451 = vmatpush1.bf16.msra.mxu0 %v431
    %452 = vmatprep.subr.bf16.mxu0 0
    %453 = vmatpush1.bf16.msra.mxu0 %v432
    %454 = vmatprep.subr.bf16.mxu0 0
    %455 = vmatpush1.bf16.msra.mxu0 %v433
    %456 = vmatprep.subr.bf16.mxu0 0
    %457 = vmatpush1.bf16.msra.mxu0 %v434
    %458 = vmatprep.subr.bf16.mxu0 0
    %459 = vmatpush1.bf16.msra.mxu0 %v435
    %460 = vmatprep.subr.bf16.mxu0 0
    %461 = vmatpush1.bf16.msra.mxu0 0
    %462 = vmatprep.subr.bf16.mxu0 0
    %463 = vmatpush1.bf16.msra.mxu0 0
    %464 = vmatprep.subr.bf16.mxu0 0
    %465 = vmatpush1.bf16.msra.mxu0 0
    %466 = vmatprep.subr.bf16.mxu0 0
    %467 = vmatpush1.bf16.msra.mxu0 0
    %468 = vmatprep.subr.bf16.mxu0 0
    %469 = vmatpush1.bf16.msra.mxu0 0
    %470 = vmatprep.subr.bf16.mxu0 0
    %471 = vmatpush1.bf16.msra.mxu0 0
    %472 = vmatprep.subr.bf16.mxu0 0
    %473 = vmatpush1.bf16.msra.mxu0 0
    %474 = vmatprep.subr.bf16.mxu0 0
    %475 = vmatpush1.bf16.msra.mxu0 0
    %476 = vmatprep.mubr.bf16.mxu0 0
    %477 = vmatmul.mubr.bf16.gmra.mrb[0].mxu0 %v365
    %v478 = vpop.f32.mrb[0].mxu0
    %v479 = vadd.f32 %v394, %v478
    %v480 = vpop.f32.mrb[0].mxu0
    %v481 = vpop.f32.mrb[0].mxu0
    %v482 = vadd.f32 %v394, %v481
    %v483 = vpop.f32.mrb[0].mxu0
    %484 = vmatprep.mubr.bf16.mxu0 0
    %485 = vmatmul.mubr.bf16.gmra.mrb[0].mxu0 %v366
    %v486 = vpop.f32.mrb[0].mxu0
    %v487 = vadd.f32 %v394, %v486
    %v488 = vpop.f32.mrb[0].mxu0
    %v489 = vpop.f32.mrb[0].mxu0
    %v490 = vadd.f32 %v394, %v489
    %v491 = vpop.f32.mrb[0].mxu0
    %492 = vmatprep.mubr.bf16.mxu0 0
    %493 = vmatmul.mubr.bf16.gmra.mrb[0].mxu0 %v367
    %v494 = vpop.f32.mrb[0].mxu0
    %v495 = vadd.f32 %v394, %v494
    %v496 = vpop.f32.mrb[0].mxu0
    %v497 = vpop.f32.mrb[0].mxu0
    %v498 = vadd.f32 %v394, %v497
    %v499 = vpop.f32.mrb[0].mxu0
    %500 = vmatprep.mubr.bf16.mxu0 0
    %501 = vmatmul.mubr.bf16.gmra.mrb[0].mxu0 %v368
    %v502 = vpop.f32.mrb[0].mxu0
    %v503 = vadd.f32 %v394, %v502
    %v504 = vpop.f32.mrb[0].mxu0
    %v505 = vpop.f32.mrb[0].mxu0
    %v506 = vadd.f32 %v394, %v505
    %v507 = vpop.f32.mrb[0].mxu0
    %508 = vmatprep.mubr.bf16.mxu0 0
    %509 = vmatmul.mubr.bf16.gmra.mrb[0].mxu0 %v369
    %v510 = vpop.f32.mrb[0].mxu0
    %v511 = vadd.f32 %v394, %v510
    %v512 = vpop.f32.mrb[0].mxu0
    %v513 = vpop.f32.mrb[0].mxu0
    %v514 = vadd.f32 %v394, %v513
    %v515 = vpop.f32.mrb[0].mxu0
    %516 = vmatprep.mubr.bf16.mxu0 0
    %517 = vmatmul.mubr.bf16.gmra.mrb[0].mxu0 %v370
    %v518 = vpop.f32.mrb[0].mxu0
    %v519 = vadd.f32 %v394, %v518
    %v520 = vpop.f32.mrb[0].mxu0
    %v521 = vpop.f32.mrb[0].mxu0
    %v522 = vadd.f32 %v394, %v521
    %v523 = vpop.f32.mrb[0].mxu0
    %524 = vmatprep.mubr.bf16.mxu0 0
    %525 = vmatmul.mubr.bf16.gmra.mrb[0].mxu0 %v371
    %v526 = vpop.f32.mrb[0].mxu0
    %v527 = vadd.f32 %v394, %v526
    %v528 = vpop.f32.mrb[0].mxu0
    %v529 = vpop.f32.mrb[0].mxu0
    %v530 = vadd.f32 %v394, %v529
    %v531 = vpop.f32.mrb[0].mxu0
    %532 = vmatprep.mubr.bf16.mxu0 0
    %533 = vmatmul.mubr.bf16.gmra.mrb[0].mxu0 %v372
    %v534 = vpop.f32.mrb[0].mxu0
    %v535 = vadd.f32 %v394, %v534
    %v536 = vpop.f32.mrb[0].mxu0
    %v537 = vpop.f32.mrb[0].mxu0
    %v538 = vadd.f32 %v394, %v537
    %v539 = vpop.f32.mrb[0].mxu0
    %540 = vdwg.mxu0
    %v541 = vmax.f32 %v479, 0.0
    %v542 = vmax.f32 %v482, 0.0
    %v543 = vmax.f32 %v487, 0.0
    %v544 = vmax.f32 %v490, 0.0
    %v545 = vmax.f32 %v495, 0.0
    %v546 = vmax.f32 %v498, 0.0
    %v547 = vmax.f32 %v503, 0.0
    %v548 = vmax.f32 %v506, 0.0
    %v549 = vmax.f32 %v511, 0.0
    %v550 = vmax.f32 %v514, 0.0
    %v551 = vmax.f32 %v519, 0.0
    %v552 = vmax.f32 %v522, 0.0
    %v553 = vmax.f32 %v527, 0.0
    %v554 = vmax.f32 %v530, 0.0
    %v555 = vmax.f32 %v535, 0.0
    %v556 = vmax.f32 %v538, 0.0
    %v557 = vpack.c.bf16 %v542, %v541
    %v558 = vpack.c.bf16 %v544, %v543
    %v559 = vpack.c.bf16 %v546, %v545
    %v560 = vpack.c.bf16 %v548, %v547
    %v561 = vpack.c.bf16 %v550, %v549
    %v562 = vpack.c.bf16 %v552, %v551
    %v563 = vpack.c.bf16 %v554, %v553
    %v564 = vpack.c.bf16 %v556, %v555
    %v565 = vld [vmem:[#allocation11] sm:$0xf]
    %v566 = vld [vmem:[#allocation11 + $0x4] sm:$0xf]
    %v567 = vld [vmem:[#allocation11 + $0x8] sm:$0xf]
    %v568 = vld [vmem:[#allocation11 + $0xc] sm:$0xf]
    %v569 = vld [vmem:[#allocation11 + $0x10] sm:$0xf]
    %v570 = vld [vmem:[#allocation11 + $0x14] sm:$0xf]
    %v571 = vld [vmem:[#allocation11 + $0x18] sm:$0xf]
    %v572 = vld [vmem:[#allocation11 + $0x1c] sm:$0xf]
    %v573 = vld [vmem:[#allocation11 + $0x20] sm:$0xf]
    %v574 = vld [vmem:[#allocation11 + $0x24] sm:$0xf]
    %v575 = vld [vmem:[#allocation11 + $0x28] sm:$0xf]
    %v576 = vld [vmem:[#allocation11 + $0x2c] sm:$0xf]
    %v577 = vld [vmem:[#allocation11 + $0x30] sm:$0xf]
    %v578 = vld [vmem:[#allocation11 + $0x34] sm:$0xf]
    %v579 = vld [vmem:[#allocation11 + $0x38] sm:$0xf]
    %v580 = vld [vmem:[#allocation11 + $0x3c] sm:$0xf]
    %v581 = vld [vmem:[#allocation13] sm:$0x1]
    %v583 = vlaneseq
    %v584 = vshrl.u32 %v583, 7
    %v585 = vsub.s32 0, %v584
    %v586 = vrot.slane %v581, %v585
    %v604 = vunpack.c.l.b16 %v565
    %v605 = vunpack.c.l.b16 %v566
    %v606 = vunpack.c.l.b16 %v567
    %v607 = vunpack.c.l.b16 %v568
    %v608 = vunpack.c.l.b16 %v569
    %v609 = vunpack.c.l.b16 %v570
    %v610 = vunpack.c.l.b16 %v571
    %v611 = vunpack.c.l.b16 %v572
    %v612 = vunpack.c.l.b16 %v573
    %v613 = vunpack.c.l.b16 %v574
    %v614 = vunpack.c.l.b16 %v575
    %v615 = vunpack.c.l.b16 %v576
    %v616 = vunpack.c.l.b16 %v577
    %v617 = vunpack.c.l.b16 %v578
    %v618 = vunpack.c.l.b16 %v579
    %v619 = vunpack.c.l.b16 %v580
    %v620 = vpack.c.b16 %v605, %v604
    %v621 = vpack.c.b16 %v607, %v606
    %v622 = vpack.c.b16 %v609, %v608
    %v623 = vpack.c.b16 %v611, %v610
    %v624 = vpack.c.b16 %v613, %v612
    %v625 = vpack.c.b16 %v615, %v614
    %v626 = vpack.c.b16 %v617, %v616
    %v627 = vpack.c.b16 %v619, %v618
    %636 = vmatprep.subr.bf16.mxu0 0
    %637 = vmatpush1.bf16.msra.mxu0 %v620
    %638 = vmatprep.subr.bf16.mxu0 0
    %639 = vmatpush1.bf16.msra.mxu0 %v621
    %640 = vmatprep.subr.bf16.mxu0 0
    %641 = vmatpush1.bf16.msra.mxu0 %v622
    %642 = vmatprep.subr.bf16.mxu0 0
    %643 = vmatpush1.bf16.msra.mxu0 %v623
    %644 = vmatprep.subr.bf16.mxu0 0
    %645 = vmatpush1.bf16.msra.mxu0 %v624
    %646 = vmatprep.subr.bf16.mxu0 0
    %647 = vmatpush1.bf16.msra.mxu0 %v625
    %648 = vmatprep.subr.bf16.mxu0 0
    %649 = vmatpush1.bf16.msra.mxu0 %v626
    %650 = vmatprep.subr.bf16.mxu0 0
    %651 = vmatpush1.bf16.msra.mxu0 %v627
    %652 = vmatprep.subr.bf16.mxu0 0
    %653 = vmatpush1.bf16.msra.mxu0 0
    %654 = vmatprep.subr.bf16.mxu0 0
    %655 = vmatpush1.bf16.msra.mxu0 0
    %656 = vmatprep.subr.bf16.mxu0 0
    %657 = vmatpush1.bf16.msra.mxu0 0
    %658 = vmatprep.subr.bf16.mxu0 0
    %659 = vmatpush1.bf16.msra.mxu0 0
    %660 = vmatprep.subr.bf16.mxu0 0
    %661 = vmatpush1.bf16.msra.mxu0 0
    %662 = vmatprep.subr.bf16.mxu0 0
    %663 = vmatpush1.bf16.msra.mxu0 0
    %664 = vmatprep.subr.bf16.mxu0 0
    %665 = vmatpush1.bf16.msra.mxu0 0
    %666 = vmatprep.subr.bf16.mxu0 0
    %667 = vmatpush1.bf16.msra.mxu0 0
    %668 = vmatprep.mubr.bf16.mxu0 0
    %669 = vmatmul.mubr.bf16.gmra.mrb[0].mxu0 %v557
    %v670 = vpop.f32.mrb[0].mxu0
    %v671 = vadd.f32 %v586, %v670
    %v672 = vpop.f32.mrb[0].mxu0
    %v673 = vpop.f32.mrb[0].mxu0
    %v674 = vadd.f32 %v586, %v673
    %v675 = vpop.f32.mrb[0].mxu0
    %676 = vmatprep.mubr.bf16.mxu0 0
    %677 = vmatmul.mubr.bf16.gmra.mrb[0].mxu0 %v558
    %v678 = vpop.f32.mrb[0].mxu0
    %v679 = vadd.f32 %v586, %v678
    %v680 = vpop.f32.mrb[0].mxu0
    %v681 = vpop.f32.mrb[0].mxu0
    %v682 = vadd.f32 %v586, %v681
    %v683 = vpop.f32.mrb[0].mxu0
    %684 = vmatprep.mubr.bf16.mxu0 0
    %685 = vmatmul.mubr.bf16.gmra.mrb[0].mxu0 %v559
    %v686 = vpop.f32.mrb[0].mxu0
    %v687 = vadd.f32 %v586, %v686
    %v688 = vpop.f32.mrb[0].mxu0
    %v689 = vpop.f32.mrb[0].mxu0
    %v690 = vadd.f32 %v586, %v689
    %v691 = vpop.f32.mrb[0].mxu0
    %692 = vmatprep.mubr.bf16.mxu0 0
    %693 = vmatmul.mubr.bf16.gmra.mrb[0].mxu0 %v560
    %v694 = vpop.f32.mrb[0].mxu0
    %v695 = vadd.f32 %v586, %v694
    %v696 = vpop.f32.mrb[0].mxu0
    %v697 = vpop.f32.mrb[0].mxu0
    %v698 = vadd.f32 %v586, %v697
    %v699 = vpop.f32.mrb[0].mxu0
    %700 = vmatprep.mubr.bf16.mxu0 0
    %701 = vmatmul.mubr.bf16.gmra.mrb[0].mxu0 %v561
    %v702 = vpop.f32.mrb[0].mxu0
    %v703 = vadd.f32 %v586, %v702
    %v704 = vpop.f32.mrb[0].mxu0
    %v705 = vpop.f32.mrb[0].mxu0
    %v706 = vadd.f32 %v586, %v705
    %v707 = vpop.f32.mrb[0].mxu0
    %708 = vmatprep.mubr.bf16.mxu0 0
    %709 = vmatmul.mubr.bf16.gmra.mrb[0].mxu0 %v562
    %v710 = vpop.f32.mrb[0].mxu0
    %v711 = vadd.f32 %v586, %v710
    %v712 = vpop.f32.mrb[0].mxu0
    %v713 = vpop.f32.mrb[0].mxu0
    %v714 = vadd.f32 %v586, %v713
    %v715 = vpop.f32.mrb[0].mxu0
    %716 = vmatprep.mubr.bf16.mxu0 0
    %717 = vmatmul.mubr.bf16.gmra.mrb[0].mxu0 %v563
    %v718 = vpop.f32.mrb[0].mxu0
    %v719 = vadd.f32 %v586, %v718
    %v720 = vpop.f32.mrb[0].mxu0
    %v721 = vpop.f32.mrb[0].mxu0
    %v722 = vadd.f32 %v586, %v721
    %v723 = vpop.f32.mrb[0].mxu0
    %724 = vmatprep.mubr.bf16.mxu0 0
    %725 = vmatmul.mubr.bf16.gmra.mrb[0].mxu0 %v564
    %v726 = vpop.f32.mrb[0].mxu0
    %v727 = vadd.f32 %v586, %v726
    %v728 = vpop.f32.mrb[0].mxu0
    %v729 = vpop.f32.mrb[0].mxu0
    %v730 = vadd.f32 %v586, %v729
    %v731 = vpop.f32.mrb[0].mxu0
    %732 = vdwg.mxu0
    %733 = vst [vmem:[#allocation14] sm:$0xff] %v671
    %734 = vst [vmem:[#allocation14 + $0x8] sm:$0xff] %v674
    %735 = vst [vmem:[#allocation14 + $0x10] sm:$0xff] %v679
    %736 = vst [vmem:[#allocation14 + $0x18] sm:$0xff] %v682
    %737 = vst [vmem:[#allocation14 + $0x20] sm:$0xff] %v687
    %738 = vst [vmem:[#allocation14 + $0x28] sm:$0xff] %v690
    %739 = vst [vmem:[#allocation14 + $0x30] sm:$0xff] %v695
    %740 = vst [vmem:[#allocation14 + $0x38] sm:$0xff] %v698
    %741 = vst [vmem:[#allocation14 + $0x40] sm:$0xff] %v703
    %742 = vst [vmem:[#allocation14 + $0x48] sm:$0xff] %v706
    %743 = vst [vmem:[#allocation14 + $0x50] sm:$0xff] %v711
    %744 = vst [vmem:[#allocation14 + $0x58] sm:$0xff] %v714
    %745 = vst [vmem:[#allocation14 + $0x60] sm:$0xff] %v719
    %746 = vst [vmem:[#allocation14 + $0x68] sm:$0xff] %v722
    %747 = vst [vmem:[#allocation14 + $0x70] sm:$0xff] %v727
    %748 = vst [vmem:[#allocation14 + $0x78] sm:$0xff] %v730
    // Predicated region
    $region58: #{tpu_custom_call.1} parent=1 // pred_check
      _
    $region59: #{tpu_custom_call.1} parent=1 // pred_check_branch
      %750 = sbr.rel (0) target = $region61
    $region60: #{tpu_custom_call.1} parent=1 // pred_region
      %s752 = ssub.s32 2048, 2048
      %753 = vsyncadd [#allocation4], %s752
      %s754 = sshll.u32 [#allocation14], 4
      %s755 = int_to_ptr.vmem [resolvable:$true] %s754
      %760 = dma.vmem_to_hbm [thread:$0]  %s755, 2048, %s7, [#allocation4], 128, 128, 8
    $region61: #{tpu_custom_call.1} parent=1 // pred_fallthru
      _
    // Predicated region
    $region62: #{tpu_custom_call.1} parent=1 // pred_check
      _
    $region63: #{tpu_custom_call.1} parent=1 // pred_check_branch
      %762 = sbr.rel (0) target = $region65
    $region64: #{tpu_custom_call.1} parent=1 // pred_region
      %763 = dma.done [#allocation4], 2048
    $region65: #{tpu_custom_call.1} parent=1 // pred_fallthru
      _
    %764 = vsyncpa [#allocation3], 1
    %765 = vsyncpa [#allocation6], 1
    %766 = vsyncpa [#allocation9], 1
    %767 = vsyncpa [#allocation12], 1
    %768 = vsyncpa [#allocation4], 1

</llo_original>
